<compile_context>
chip_gen: v6e
topology: v6e:2x2x1
jax: 0.10.0
libtpu: 0.0.40
codegen_flags: <defaults>
</compile_context>

<pallas_src>
import functools

import jax
import jax.numpy as jnp
from jax import lax
from jax.experimental import pallas as pl
from jax.experimental.pallas import tpu as pltpu

LANE = 128          # TPU lane width
SUB_MAX = 512       # accumulator width / per-chunk lane width inside a tile


def _floor_to(a, b):
    return (a // b) * b


def _channel_attention_kernel(x_ref, w1_ref, w2_ref, o_ref, sum_acc, max_acc,
                              *, hw, thw, sub, inv_hw, mask_tail):
    # x_ref   : (1, C, thw)  one HW tile of one batch element (C x flat-spatial)
    # w1_ref  : (Ch, C)      fc1 weight (Conv2d(C, C//16, 1) squeezed)
    # w2_ref  : (C, Ch)      fc2 weight
    # o_ref   : (1, 1, C)    lane-dense per-batch attention row
    # sum_acc : (C, sub) f32 running spatial sum   (persists across hw steps)
    # max_acc : (C, sub) f32 running spatial max   (persists across hw steps)
    hw_i = pl.program_id(1)

    @pl.when(hw_i == 0)
    def _init():
        sum_acc[...] = jnp.zeros_like(sum_acc)
        max_acc[...] = jnp.full_like(max_acc, -jnp.inf)

    # ---- one-pass tiled accumulation: VPU adds/maxes on (C, sub) chunks ----
    n_sub = thw // sub
    for j in range(n_sub):                                   # small static unroll
        chunk = x_ref[0, :, j * sub:(j + 1) * sub].astype(jnp.float32)  # (C, sub)
        if mask_tail:
            # Global flat-spatial position of each lane; positions >= HW are
            # out-of-bounds tail lanes (unspecified data) and must be masked.
            pos = (hw_i * thw + j * sub
                   + lax.broadcasted_iota(jnp.int32, chunk.shape, 1))
            valid = pos < hw
            sum_acc[...] += jnp.where(valid, chunk, 0.0)
            max_acc[...] = jnp.maximum(max_acc[...],
                                       jnp.where(valid, chunk, -jnp.inf))
        else:
            sum_acc[...] += chunk
            max_acc[...] = jnp.maximum(max_acc[...], chunk)

    # ---- finalize: fused shared-MLP over [avg | max] + sigmoid, once per n ----
    @pl.when(hw_i == pl.num_programs(1) - 1)
    def _finalize():
        c = sum_acc.shape[0]
        avg = jnp.sum(sum_acc[...], axis=1, keepdims=True) * inv_hw   # (C, 1)
        mx = jnp.max(max_acc[...], axis=1, keepdims=True)             # (C, 1)

        # v = concat([avg, max], axis=1) built with a lane-broadcast select
        # (avoids a minor-dim concatenate of width-1 operands).
        sel = lax.broadcasted_iota(jnp.int32, (c, 2), 1) == 0
        v = jnp.where(sel, avg, mx)                                   # (C, 2)

        w1 = w1_ref[...].astype(jnp.float32)                          # (Ch, C)
        w2 = w2_ref[...].astype(jnp.float32)                          # (C, Ch)

        # fc1 + ReLU on both branches at once (one MXU push instead of two).
        h = jnp.maximum(jnp.dot(w1, v, preferred_element_type=jnp.float32), 0.0)  # (Ch, 2)
        # fc2 for both branches, emitted as (W2 @ h)^T directly so the result
        # is lane-dense: y[i, k] = sum_j h[j, i] * w2[k, j]  -> (2, C).
        y = lax.dot_general(h, w2, (((0,), (1,)), ((), ())),
                            preferred_element_type=jnp.float32)       # (2, C)

        att = jax.nn.sigmoid(jnp.sum(y, axis=0, keepdims=True))       # (1, C)
        o_ref[0] = att.astype(o_ref.dtype)


def channel_attention(x, w1, w2, *, tile_bytes=2 * 1024 * 1024,
                      vmem_limit_bytes=None):
    """x: (N, C, H, W); w1: (C//16, C); w2: (C, C//16). Returns (N, C, 1, 1)."""
    N, C, H, W = x.shape
    Ch = w1.shape[0]
    HW = H * W
    itemsize = x.dtype.itemsize

    # --- pick the HW tile width (lanes per grid step) from a VMEM budget ---
    if HW <= LANE:
        thw = HW                                   # single full-extent block
    else:
        budget_lanes = max(LANE, _floor_to(tile_bytes // (C * itemsize), LANE))
        budget_lanes = min(budget_lanes, 64 * SUB_MAX)   # cap tile / unroll
        thw = min(_floor_to(HW, LANE), budget_lanes)
        if thw > SUB_MAX:
            thw = _floor_to(thw, SUB_MAX)          # keep divisible by SUB_MAX
    sub = min(SUB_MAX, thw)
    num_hw = pl.cdiv(HW, thw)
    mask_tail = (HW % thw) != 0
    inv_hw = 1.0 / float(HW)

    xr = x.reshape(N, C, HW)

    if vmem_limit_bytes is None:
        tile_b = C * thw * itemsize                # one input buffer
        vmem_limit_bytes = int(min(64 * 1024 * 1024,
                                   max(16 * 1024 * 1024, 4 * tile_b + (2 << 20))))

    kernel = functools.partial(_channel_attention_kernel,
                               hw=HW, thw=thw, sub=sub,
                               inv_hw=inv_hw, mask_tail=mask_tail)

    out = pl.pallas_call(
        kernel,
        out_shape=jax.ShapeDtypeStruct((N, 1, C), x.dtype),
        grid_spec=pltpu.PrefetchScalarGridSpec(
            num_scalar_prefetch=0,
            grid=(N, num_hw),
            in_specs=[
                pl.BlockSpec((1, C, thw), lambda n, h: (n, 0, h)),
                pl.BlockSpec((Ch, C), lambda n, h: (0, 0)),
                pl.BlockSpec((C, Ch), lambda n, h: (0, 0)),
            ],
            out_specs=pl.BlockSpec((1, 1, C), lambda n, h: (n, 0, 0)),
            scratch_shapes=[
                pltpu.VMEM((C, sub), jnp.float32),   # running sum
                pltpu.VMEM((C, sub), jnp.float32),   # running max
            ],
        ),
        compiler_params=pltpu.CompilerParams(
            dimension_semantics=("parallel", "arbitrary"),
            vmem_limit_bytes=vmem_limit_bytes,
        ),
    )(xr, w1, w2)

    return out.reshape(N, C, 1, 1)


def channel_attention_ref(x, w1, w2):
    # Pure-JAX reference mirroring the PyTorch forward.
    avg = jnp.mean(x, axis=(2, 3))                       # (N, C)
    mx = jnp.max(x, axis=(2, 3))                         # (N, C)

    def mlp(v):                                          # (N, C)
        h = jnp.maximum(v @ w1.T, 0.0)                   # (N, Ch)
        return h @ w2.T                                  # (N, C)

    out = jax.nn.sigmoid(mlp(avg) + mlp(mx))
    return out[:, :, None, None]


if __name__ == "__main__":
    key = jax.random.PRNGKey(0)
    kx, k1, k2 = jax.random.split(key, 3)

    N, C, H, W = 2, 32, 20, 20          # ChannelAttention(32): hidden = 32 // 16 = 2
    Ch = C // 16

    x = jax.random.normal(kx, (N, C, H, W), dtype=jnp.float32)
    # Conv2d(C, C//16, 1, bias=False) weight (C//16, C, 1, 1) -> (C//16, C)
    w1 = jax.random.normal(k1, (Ch, C), dtype=jnp.float32) * 0.1
    # Conv2d(C//16, C, 1, bias=False) weight (C, C//16, 1, 1) -> (C, C//16)
    w2 = jax.random.normal(k2, (C, Ch), dtype=jnp.float32) * 0.1

    ref = channel_attention_ref(x, w1, w2)

    # Default budget-sized tiling (here: 2 HW tiles with a masked tail).
    out = channel_attention(x, w1, w2)
    jax.block_until_ready(out)
    assert out.shape == (N, C, 1, 1)
    assert jnp.allclose(out, ref, atol=1e-5, rtol=1e-5)

    # Force a small tile to exercise the multi-step HW reduction + tail mask.
    out_tiled = channel_attention(x, w1, w2, tile_bytes=C * 128 * 4)
    jax.block_until_ready(out_tiled)
    assert jnp.allclose(out_tiled, ref, atol=1e-5, rtol=1e-5)

    print("KERNEL_OK")
</pallas_src>

<mosaic_0001>
module attributes {stable_mosaic.version = 11 : i64} {
  func.func @_channel_attention_kernel(%arg0: i32, %arg1: i32, %arg2: memref<1x32x384xf32, #tpu.memory_space<vmem>>, %arg3: memref<2x32xf32, #tpu.memory_space<vmem>>, %arg4: memref<32x2xf32, #tpu.memory_space<vmem>>, %arg5: memref<1x1x32xf32, #tpu.memory_space<vmem>>, %arg6: memref<32x384xf32, #tpu.memory_space<vmem>>, %arg7: memref<32x384xf32, #tpu.memory_space<vmem>>) attributes {dimension_semantics = [#tpu.dimension_semantics<parallel>, #tpu.dimension_semantics<arbitrary>], iteration_bounds = array<i64: 2, 2>, scalar_prefetch = 0 : i64, scratch_operands = 2 : i64, tpu.core_type = #tpu.core_type<tc>, window_params = [{transform_indices = @transform_0, window_bounds = array<i64: 1, 32, 384>}, {pipeline_mode = #tpu.pipeline_mode<synchronous>, transform_indices = @transform_1, window_bounds = array<i64: 2, 32>}, {pipeline_mode = #tpu.pipeline_mode<synchronous>, transform_indices = @transform_2, window_bounds = array<i64: 32, 2>}, {transform_indices = @transform_3, window_bounds = array<i64: 1, 1, 32>}]} {
    %c0_i32 = arith.constant 0 : i32
    %0 = arith.cmpi eq, %arg1, %c0_i32 : i32
    %1 = arith.extui %0 : i1 to i32
    %c0_i32_0 = arith.constant 0 : i32
    %2 = arith.cmpi ne, %1, %c0_i32_0 : i32
    scf.if %2 {
      %cst_14 = arith.constant 0.000000e+00 : f32
      %25 = vector.broadcast %cst_14 : f32 to vector<32x384xf32>
      %c0_15 = arith.constant 0 : index
      %c0_16 = arith.constant 0 : index
      %26 = vector.load %arg6[%c0_15, %c0_16] : memref<32x384xf32, #tpu.memory_space<vmem>>, vector<32x384xf32>
      tpu.vector_store %arg6[%c0_15, %c0_16], %25 {strides = array<i32>} : memref<32x384xf32, #tpu.memory_space<vmem>>, vector<32x384xf32>,
      %cst_17 = arith.constant 0xFF800000 : f32
      %27 = vector.broadcast %cst_17 : f32 to vector<32x384xf32>
      %c0_18 = arith.constant 0 : index
      %c0_19 = arith.constant 0 : index
      %28 = vector.load %arg7[%c0_18, %c0_19] : memref<32x384xf32, #tpu.memory_space<vmem>>, vector<32x384xf32>
      tpu.vector_store %arg7[%c0_18, %c0_19], %27 {strides = array<i32>} : memref<32x384xf32, #tpu.memory_space<vmem>>, vector<32x384xf32>,
    } else {
    }
    %c0 = arith.constant 0 : index
    %c0_1 = arith.constant 0 : index
    %c0_2 = arith.constant 0 : index
    %3 = vector.load %arg2[%c0, %c0_1, %c0_2] : memref<1x32x384xf32, #tpu.memory_space<vmem>>, vector<1x32x384xf32>
    %4 = vector.shape_cast %3 : vector<1x32x384xf32> to vector<32x384xf32>
    %c384_i32 = arith.constant 384 : i32
    %5 = arith.muli %arg1, %c384_i32 : i32
    %c0_i32_3 = arith.constant 0 : i32
    %6 = arith.addi %5, %c0_i32_3 : i32
    %7 = tpu.iota {dimensions = array<i32: 1>} : vector<32x384xi32>
    %8 = vector.broadcast %6 : i32 to vector<32x384xi32>
    %9 = arith.addi %8, %7 : vector<32x384xi32>
    %c400_i32 = arith.constant 400 : i32
    %10 = vector.broadcast %c400_i32 : i32 to vector<32x384xi32>
    %11 = arith.cmpi slt, %9, %10 : vector<32x384xi32>
    %c0_4 = arith.constant 0 : index
    %c0_5 = arith.constant 0 : index
    %12 = vector.load %arg6[%c0_4, %c0_5] : memref<32x384xf32, #tpu.memory_space<vmem>>, vector<32x384xf32>
    %cst = arith.constant 0.000000e+00 : f32
    %13 = vector.broadcast %cst : f32 to vector<32x384xf32>
    %14 = arith.select %11, %4, %13 : vector<32x384xi1>, vector<32x384xf32>
    %15 = arith.addf %12, %14 : vector<32x384xf32>
    %c0_6 = arith.constant 0 : index
    %c0_7 = arith.constant 0 : index
    %16 = vector.load %arg6[%c0_6, %c0_7] : memref<32x384xf32, #tpu.memory_space<vmem>>, vector<32x384xf32>
    tpu.vector_store %arg6[%c0_6, %c0_7], %15 {strides = array<i32>} : memref<32x384xf32, #tpu.memory_space<vmem>>, vector<32x384xf32>,
    %c0_8 = arith.constant 0 : index
    %c0_9 = arith.constant 0 : index
    %17 = vector.load %arg7[%c0_8, %c0_9] : memref<32x384xf32, #tpu.memory_space<vmem>>, vector<32x384xf32>
    %cst_10 = arith.constant 0xFF800000 : f32
    %18 = vector.broadcast %cst_10 : f32 to vector<32x384xf32>
    %19 = arith.select %11, %4, %18 : vector<32x384xi1>, vector<32x384xf32>
    %20 = arith.maximumf %17, %19 : vector<32x384xf32>
    %c0_11 = arith.constant 0 : index
    %c0_12 = arith.constant 0 : index
    %21 = vector.load %arg7[%c0_11, %c0_12] : memref<32x384xf32, #tpu.memory_space<vmem>>, vector<32x384xf32>
    tpu.vector_store %arg7[%c0_11, %c0_12], %20 {strides = array<i32>} : memref<32x384xf32, #tpu.memory_space<vmem>>, vector<32x384xf32>,
    %c1_i32 = arith.constant 1 : i32
    %22 = arith.cmpi eq, %arg1, %c1_i32 : i32
    %23 = arith.extui %22 : i1 to i32
    %c0_i32_13 = arith.constant 0 : i32
    %24 = arith.cmpi ne, %23, %c0_i32_13 : i32
    scf.if %24 {
      %c0_14 = arith.constant 0 : index
      %c0_15 = arith.constant 0 : index
      %25 = vector.load %arg6[%c0_14, %c0_15] : memref<32x384xf32, #tpu.memory_space<vmem>>, vector<32x384xf32>
      %cst_16 = arith.constant dense<0.000000e+00> : vector<32xf32>
      %26 = vector.multi_reduction <add>, %25, %cst_16 [1] : vector<32x384xf32> to vector<32xf32>
      %27 = vector.shape_cast %26 : vector<32xf32> to vector<32x1xf32>
      %cst_17 = arith.constant 2.500000e-03 : f32
      %28 = vector.broadcast %cst_17 : f32 to vector<32x1xf32>
      %29 = arith.mulf %27, %28 : vector<32x1xf32>
      %c0_18 = arith.constant 0 : index
      %c0_19 = arith.constant 0 : index
      %30 = vector.load %arg7[%c0_18, %c0_19] : memref<32x384xf32, #tpu.memory_space<vmem>>, vector<32x384xf32>
      %cst_20 = arith.constant dense<0xFF800000> : vector<32xf32>
      %31 = vector.multi_reduction <maximumf>, %30, %cst_20 [1] : vector<32x384xf32> to vector<32xf32>
      %32 = vector.shape_cast %31 : vector<32xf32> to vector<32x1xf32>
      %33 = tpu.iota {dimensions = array<i32: 1>} : vector<32x2xi32>
      %c0_i32_21 = arith.constant 0 : i32
      %34 = vector.broadcast %c0_i32_21 : i32 to vector<32x2xi32>
      %35 = arith.cmpi eq, %33, %34 : vector<32x2xi32>
      %36 = vector.shape_cast %29 : vector<32x1xf32> to vector<32x1xf32>
      %37 = vector.broadcast %36 : vector<32x1xf32> to vector<32x2xf32>
      %38 = vector.shape_cast %32 : vector<32x1xf32> to vector<32x1xf32>
      %39 = vector.broadcast %38 : vector<32x1xf32> to vector<32x2xf32>
      %40 = arith.select %35, %37, %39 : vector<32x2xi1>, vector<32x2xf32>
      %c0_22 = arith.constant 0 : index
      %c0_23 = arith.constant 0 : index
      %41 = vector.load %arg3[%c0_22, %c0_23] : memref<2x32xf32, #tpu.memory_space<vmem>>, vector<2x32xf32>
      %c0_24 = arith.constant 0 : index
      %c0_25 = arith.constant 0 : index
      %42 = vector.load %arg4[%c0_24, %c0_25] : memref<32x2xf32, #tpu.memory_space<vmem>>, vector<32x2xf32>
      %cst_26 = arith.constant dense<0.000000e+00> : vector<2x2xf32>
      %43 = tpu.matmul %41, %40, %cst_26 {dimension_numbers = #tpu.dot_dimension_numbers<[1], [0], [0], [1], [0, 0, 1, 1], [], []>} : vector<2x32xf32>, vector<32x2xf32>, vector<2x2xf32> -> vector<2x2xf32>
      %cst_27 = arith.constant 0.000000e+00 : f32
      %44 = vector.broadcast %cst_27 : f32 to vector<2x2xf32>
      %45 = arith.maximumf %43, %44 : vector<2x2xf32>
      %cst_28 = arith.constant dense<0.000000e+00> : vector<2x32xf32>
      %46 = tpu.matmul %45, %42, %cst_28 {dimension_numbers = #tpu.dot_dimension_numbers<[0], [1], [1], [0], [0, 1, 1, 0], [], []>} : vector<2x2xf32>, vector<32x2xf32>, vector<2x32xf32> -> vector<2x32xf32>
      %cst_29 = arith.constant dense<0.000000e+00> : vector<32xf32>
      %47 = vector.multi_reduction <add>, %46, %cst_29 [0] : vector<2x32xf32> to vector<32xf32>
      %48 = vector.shape_cast %47 : vector<32xf32> to vector<1x32xf32>
      %49 = arith.negf %48 : vector<1x32xf32>
      %50 = math.exp %49 : vector<1x32xf32>
      %cst_30 = arith.constant 1.000000e+00 : f32
      %51 = vector.broadcast %cst_30 : f32 to vector<1x32xf32>
      %52 = arith.addf %51, %50 : vector<1x32xf32>
      %53 = arith.divf %51, %52 : vector<1x32xf32>
      %c0_31 = arith.constant 0 : index
      %c0_32 = arith.constant 0 : index
      %c0_33 = arith.constant 0 : index
      %54 = vector.load %arg5[%c0_31, %c0_32, %c0_33] : memref<1x1x32xf32, #tpu.memory_space<vmem>>, vector<1x1x32xf32>
      %55 = vector.shape_cast %54 : vector<1x1x32xf32> to vector<1x32xf32>
      %56 = vector.shape_cast %53 : vector<1x32xf32> to vector<1x1x32xf32>
      tpu.vector_store %arg5[%c0_31, %c0_32, %c0_33], %56 {strides = array<i32>} : memref<1x1x32xf32, #tpu.memory_space<vmem>>, vector<1x1x32xf32>,
    } else {
    }
    return
  }
  func.func @transform_0(%arg0: i32, %arg1: i32) -> (i32, i32, i32) {
    %c0_i32 = arith.constant 0 : i32
    %c0_i32_0 = arith.constant 0 : i32
    return %arg0, %c0_i32, %arg1 : i32, i32, i32
  }
  func.func @transform_1(%arg0: i32, %arg1: i32) -> (i32, i32) {
    %c0_i32 = arith.constant 0 : i32
    %c0_i32_0 = arith.constant 0 : i32
    %c0_i32_1 = arith.constant 0 : i32
    return %c0_i32, %c0_i32_0 : i32, i32
  }
  func.func @transform_2(%arg0: i32, %arg1: i32) -> (i32, i32) {
    %c0_i32 = arith.constant 0 : i32
    %c0_i32_0 = arith.constant 0 : i32
    %c0_i32_1 = arith.constant 0 : i32
    return %c0_i32, %c0_i32_0 : i32, i32
  }
  func.func @transform_3(%arg0: i32, %arg1: i32) -> (i32, i32, i32) {
    %c0_i32 = arith.constant 0 : i32
    %c0_i32_0 = arith.constant 0 : i32
    %c0_i32_1 = arith.constant 0 : i32
    return %arg0, %c0_i32, %c0_i32_0 : i32, i32, i32
  }
}

</mosaic_0001>

<llo_original>
// kernel: tpu_custom_call.1
$region0: #{tpu_custom_call.1}
  #allocation0 [shape = 'u32[]', space=smem, size = 0x4, offset = 0x4, fixed_abs, tag = 'smem constant byte address 0x4 - core index']
  #allocation1 [shape = 'u32[144,128]{1,0:T(1,128)}', space=vmem, size = 0x12000, scoped, tag = 'internal scratch']
  #allocation2 [shape = 'f32[32,384]{1,0:T(8,128)}', space=vmem, size = 0xc000, scoped, tag = 'scratch operand']
  #allocation3 [shape = 'f32[32,384]{1,0:T(8,128)}', space=vmem, size = 0xc000, scoped, tag = 'scratch operand']
  %s0 = inlined_call_operand.hbm [shape: f32[2,32,400], index: 0, kind: input, shape index: {}]
  %s1 = inlined_call_operand.vmem [shape: f32[2,32], index: 1, kind: input, shape index: {}]
  %s2 = inlined_call_operand.vmem [shape: f32[32,2], index: 2, kind: input, shape index: {}]
  %s3 = inlined_call_operand.hbm [shape: f32[2,1,32], index: 3, kind: output, shape index: {}]
  %s4 = sld [smem:[#allocation0]]
  $region57: #{tpu_custom_call.1} parent=0
    _
  %s6 = ssub.s32 1, %s4
  %s7 = scalar_select 0, %s6, %s4
  $region1: #{tpu_custom_call.1} parent=0
    #allocation4 [shape = 'u8[98304]{0}', space=vmem, size = 0x18000, scoped, tag = 'input window, operand 0']
    #allocation5 [shape = 's32[2]{0}', space=sflag, size = 0x8, scoped, tag = 'scoped memory for tpu_custom_call.1']
    #allocation6 [shape = 's32[2]{0}', space=sflag, size = 0x8, scoped, tag = 'scoped memory for tpu_custom_call.1']
    #allocation7 [shape = 'u8[1024]{0}', space=vmem, size = 0x400, scoped, tag = 'output window, operand 0']
    %8 = vsyncpa [#allocation5], 0
    %s9 = scalar_lea.sflag [#allocation5], 1
    %10 = vsyncpa %s9, 0
    %11 = vsyncpa [#allocation6], 0
    %s12 = scalar_lea.sflag [#allocation6], 1
    %13 = vsyncpa %s12, 0
    loop: start=0, step=1, limit=6
    $region2: #{tpu_custom_call.1} parent=1 // loop_pre_header
      _
    $region3: #{tpu_custom_call.1} parent=1 // loop_header
      %s15 = sphi 0, %s19
      %p16 = scmp.ge.s32.totalorder %s15, 6
      %s22 = sphi 0, %s34
      %s23 = sphi 0, %s30
      %s24 = sphi 0, %s22
      %s25 = sphi 0, %s23
      %s26 = sphi 0, %s24
      %s27 = sphi 0, %s25
      %s39 = sphi 0, %s41
      %s42 = sphi 0, %s39
      %s43 = sphi 0, %s42
      %s59 = sphi 0, %s43
      %s63 = sphi 0, %s63
      %s65 = sphi 0, %s63
      %s66 = sphi 0, %s65
      %s80 = sphi 0, %s66
      %s84 = sphi 0, %s84
      %s86 = sphi 0, %s84
      %s87 = sphi 0, %s86
      %s101 = sphi 0, %s87
      %s107 = sphi 0, %s109
      %s110 = sphi 0, %s107
      %s111 = sphi 0, %s110
      %s127 = sphi 0, %s111
    $region4: #{tpu_custom_call.1} parent=1 // loop_header_branch
      %18 = sbr.rel (%p16) target = $region8
    $region5: #{tpu_custom_call.1} parent=1 // loop_body
      %s20 = ssub.s32 %s15, 1
      %s21 = ssub.s32 %s15, 2
      %s28 = sadd.s32 1, %s23
      %p29 = scmp.ge.s32.totalorder %s28, 2
      %s30 = scalar_select %p29, 0, %s28
      %s31 = sadd.s32 1, %s22
      %s32 = scalar_select %p29, %s31, %s22
      %p33 = scmp.ge.s32.totalorder %s32, 2
      %s34 = scalar_select %p33, 0, %s32
      %s35 = ssub.s32 %s22, %s34
      %s36 = ssub.s32 %s23, %s30
      %s37 = sor.u32 %s35, %s36
      %p38 = scmp.eq.s32.totalorder %s37, 0
      %s40 = sadd.s32 %s39, 1
      %s41 = scalar_select %p38, %s39, %s40
      %p44 = pneg %p38
      %p45 = scmp.eq.s32.totalorder %s15, 3
      %p46 = por %p44, %p45
      %p47 = scmp.ne.s32.totalorder %s39, %s42
      %p48 = scmp.eq.s32.totalorder %s15, 0
      %p49 = por %p47, %p48
      %p50 = scmp.ne.s32.totalorder %s39, %s42
      %p51 = scmp.eq.s32.totalorder %s20, 3
      %p52 = por %p50, %p51
      %p53 = scmp.ne.s32.totalorder %s42, %s43
      %p54 = scmp.eq.s32.totalorder %s20, 0
      %p55 = por %p53, %p54
      %p56 = scmp.ne.s32.totalorder %s42, %s43
      %p57 = scmp.eq.s32.totalorder %s21, 3
      %p58 = por %p56, %p57
      %p60 = scmp.ne.s32.totalorder %s43, %s59
      %p61 = scmp.eq.s32.totalorder %s21, 0
      %p62 = por %p60, %p61
      %s64 = sadd.s32 %s63, 1
      %p67 = scmp.eq.s32.totalorder %s15, 3
      %p68 = scmp.ne.s32.totalorder %s63, %s65
      %p69 = scmp.eq.s32.totalorder %s15, 0
      %p70 = por %p68, %p69
      %p71 = scmp.ne.s32.totalorder %s63, %s65
      %p72 = scmp.eq.s32.totalorder %s20, 3
      %p73 = por %p71, %p72
      %p74 = scmp.ne.s32.totalorder %s65, %s66
      %p75 = scmp.eq.s32.totalorder %s20, 0
      %p76 = por %p74, %p75
      %p77 = scmp.ne.s32.totalorder %s65, %s66
      %p78 = scmp.eq.s32.totalorder %s21, 3
      %p79 = por %p77, %p78
      %p81 = scmp.ne.s32.totalorder %s66, %s80
      %p82 = scmp.eq.s32.totalorder %s21, 0
      %p83 = por %p81, %p82
      %s85 = sadd.s32 %s84, 1
      %p88 = scmp.eq.s32.totalorder %s15, 3
      %p89 = scmp.ne.s32.totalorder %s84, %s86
      %p90 = scmp.eq.s32.totalorder %s15, 0
      %p91 = por %p89, %p90
      %p92 = scmp.ne.s32.totalorder %s84, %s86
      %p93 = scmp.eq.s32.totalorder %s20, 3
      %p94 = por %p92, %p93
      %p95 = scmp.ne.s32.totalorder %s86, %s87
      %p96 = scmp.eq.s32.totalorder %s20, 0
      %p97 = por %p95, %p96
      %p98 = scmp.ne.s32.totalorder %s86, %s87
      %p99 = scmp.eq.s32.totalorder %s21, 3
      %p100 = por %p98, %p99
      %p102 = scmp.ne.s32.totalorder %s87, %s101
      %p103 = scmp.eq.s32.totalorder %s21, 0
      %p104 = por %p102, %p103
      %s105 = ssub.s32 %s22, %s34
      %p106 = scmp.eq.s32.totalorder %s105, 0
      %s108 = sadd.s32 %s107, 1
      %s109 = scalar_select %p106, %s107, %s108
      %p112 = pneg %p106
      %p113 = scmp.eq.s32.totalorder %s15, 3
      %p114 = por %p112, %p113
      %p115 = scmp.ne.s32.totalorder %s107, %s110
      %p116 = scmp.eq.s32.totalorder %s15, 0
      %p117 = por %p115, %p116
      %p118 = scmp.ne.s32.totalorder %s107, %s110
      %p119 = scmp.eq.s32.totalorder %s20, 3
      %p120 = por %p118, %p119
      %p121 = scmp.ne.s32.totalorder %s110, %s111
      %p122 = scmp.eq.s32.totalorder %s20, 0
      %p123 = por %p121, %p122
      %p124 = scmp.ne.s32.totalorder %s110, %s111
      %p125 = scmp.eq.s32.totalorder %s21, 3
      %p126 = por %p124, %p125
      %p128 = scmp.ne.s32.totalorder %s111, %s127
      %p129 = scmp.eq.s32.totalorder %s21, 0
      %p130 = por %p128, %p129
      %p131 = scmp.le.s32.totalorder 1, %s15
      %p132 = scmp.lt.s32.totalorder %s15, 5
      %p133 = pnand %p131, %p132
      %p134 = pneg %p133
      // Predicated region
      $region9: #{tpu_custom_call.1} parent=5 // pred_check
        _
      $region10: #{tpu_custom_call.1} parent=5 // pred_check_branch
        %136 = sbr.rel (%p133) target = $region12
      $region11: #{tpu_custom_call.1} parent=5 // pred_region
        %s137 = ssub.s32 %s15, 1
        // Predicated region
        $region13: #{tpu_custom_call.1} parent=11 // pred_check
          %p138 = pneg %p76
        $region14: #{tpu_custom_call.1} parent=11 // pred_check_branch
          %140 = sbr.rel (%p138) target = $region16
        $region15: #{tpu_custom_call.1} parent=11 // pred_region
          _
        $region16: #{tpu_custom_call.1} parent=11 // pred_fallthru
          _
        // Predicated region
        $region17: #{tpu_custom_call.1} parent=11 // pred_check
          %p141 = pneg %p97
        $region18: #{tpu_custom_call.1} parent=11 // pred_check_branch
          %143 = sbr.rel (%p141) target = $region20
        $region19: #{tpu_custom_call.1} parent=11 // pred_region
          _
        $region20: #{tpu_custom_call.1} parent=11 // pred_fallthru
          _
      $region12: #{tpu_custom_call.1} parent=5 // pred_fallthru
        _
      %p144 = scmp.lt.s32.totalorder %s15, 4
      // Predicated region
      $region21: #{tpu_custom_call.1} parent=5 // pred_check
        %p145 = pneg %p144
      $region22: #{tpu_custom_call.1} parent=5 // pred_check_branch
        %147 = sbr.rel (%p145) target = $region24
      $region23: #{tpu_custom_call.1} parent=5 // pred_region
        // Predicated region
        $region25: #{tpu_custom_call.1} parent=23 // pred_check
          %p148 = pneg %p49
        $region26: #{tpu_custom_call.1} parent=23 // pred_check_branch
          %150 = sbr.rel (%p148) target = $region28
        $region27: #{tpu_custom_call.1} parent=23 // pred_region
          %s151 = sand.u32 %s39, 1
          %s152 = scalar_lea.sflag [#allocation5], %s151
          %s153 = sand.u32 %s39, 1
          %s154 = smul.addr %s153, 96
          %s155 = scalar_lea.vmem [#allocation4], %s154
          %s156 = smul.u32 3, %s23
          %s157 = ssub.s32 4, %s156
          %p158 = scmp.lt.s32.totalorder %s157, 3
          %s159 = scalar_select %p158, %s157, 3
          %s160 = smul.u32 512, %s159
          %s162 = ssub.s32 1536, %s160
          %163 = vsyncadd %s152, %s162
          %p164 = scmp.ne.s32.totalorder 0, %s160
          %s165 = smul.addr %s22, 16
          %s166 = sadd.s32 %s156, %s165
          %s167 = smul.addr %s166, 128
          %s168 = scalar_lea.hbm %s0, %s167
          %s169 = smul.u32 %s159, 8
          %s170 = smul.u32 %s169, 4
          %s171 = sshll.u32 %s155, 4
          %s172 = int_to_ptr.vmem [resolvable:$true] %s171
          %s173 = sshll.u32 %s170, 4
          %177 = dma.hbm_to_vmem [thread:$0]  (%p164), %s168, %s173, %s172, %s152, 512, 384, %s169
        $region28: #{tpu_custom_call.1} parent=23 // pred_fallthru
          _
      $region24: #{tpu_custom_call.1} parent=5 // pred_fallthru
        _
      %p178 = scmp.le.s32.totalorder 1, %s15
      %p179 = scmp.lt.s32.totalorder %s15, 5
      %p180 = pnand %p178, %p179
      %p181 = pneg %p180
      // Predicated region
      $region29: #{tpu_custom_call.1} parent=5 // pred_check
        _
      $region30: #{tpu_custom_call.1} parent=5 // pred_check_branch
        %183 = sbr.rel (%p180) target = $region32
      $region31: #{tpu_custom_call.1} parent=5 // pred_region
        %s184 = ssub.s32 %s15, 1
        %s185 = sand.u32 %s42, 1
        %s186 = scalar_lea.sflag [#allocation5], %s185
        %s187 = sand.u32 %s42, 1
        %s188 = smul.addr %s187, 96
        %s189 = scalar_lea.vmem [#allocation4], %s188
        // Predicated region
        $region33: #{tpu_custom_call.1} parent=31 // pred_check
          %p190 = pneg %p55
        $region34: #{tpu_custom_call.1} parent=31 // pred_check_branch
          %192 = sbr.rel (%p190) target = $region36
        $region35: #{tpu_custom_call.1} parent=31 // pred_region
          %193 = dma.done %s186, 1536
        $region36: #{tpu_custom_call.1} parent=31 // pred_fallthru
          _
        %s194 = sand.u32 %s42, 1
        %s195 = scalar_lea.sflag [#allocation5], %s194
        %s196 = sand.u32 %s42, 1
        %s197 = smul.addr %s196, 96
        %s198 = scalar_lea.vmem [#allocation4], %s197
        %p199 = pneg %p55
        %p200 = pneg %p52
        %p201 = pneg %p76
        %p202 = pneg %p73
        %p203 = pneg %p97
        %p204 = pneg %p94
        %p205 = pneg %p123
        %p206 = pneg %p120
        %s207 = sand.u32 %s110, 1
        %s208 = scalar_lea.sflag [#allocation6], %s207
        %s209 = sand.u32 %s110, 1
        %s210 = scalar_lea.vmem [#allocation7], %s209
        %s211 = smul.u32 3, %s25
        %s212 = ssub.s32 4, %s211
        %p213 = scmp.lt.s32.totalorder %s212, 3
        %s214 = scalar_select %p213, %s212, 3
        %s215 = smul.u32 512, %s214
        %p216 = scmp.eq.s32.totalorder %s25, 0
        // Predicated region
        $region37: #{tpu_custom_call.1} parent=31 // pred_check
          %p217 = pneg %p216
        $region38: #{tpu_custom_call.1} parent=31 // pred_check_branch
          %219 = sbr.rel (%p217) target = $region40
        $region39: #{tpu_custom_call.1} parent=31 // pred_region
          %220 = vst [vmem:[#allocation2] sm:$0xff] 0.0
          %221 = vst [vmem:[#allocation2 + $0x8] sm:$0xff] 0.0
          %222 = vst [vmem:[#allocation2 + $0x10] sm:$0xff] 0.0
          %223 = vst [vmem:[#allocation2 + $0x18] sm:$0xff] 0.0
          %224 = vst [vmem:[#allocation2 + $0x20] sm:$0xff] 0.0
          %225 = vst [vmem:[#allocation2 + $0x28] sm:$0xff] 0.0
          %226 = vst [vmem:[#allocation2 + $0x30] sm:$0xff] 0.0
          %227 = vst [vmem:[#allocation2 + $0x38] sm:$0xff] 0.0
          %228 = vst [vmem:[#allocation2 + $0x40] sm:$0xff] 0.0
          %229 = vst [vmem:[#allocation2 + $0x48] sm:$0xff] 0.0
          %230 = vst [vmem:[#allocation2 + $0x50] sm:$0xff] 0.0
          %231 = vst [vmem:[#allocation2 + $0x58] sm:$0xff] 0.0
          %232 = vst [vmem:[#allocation3] sm:$0xff] -inf
          %233 = vst [vmem:[#allocation3 + $0x8] sm:$0xff] -inf
          %234 = vst [vmem:[#allocation3 + $0x10] sm:$0xff] -inf
          %235 = vst [vmem:[#allocation3 + $0x18] sm:$0xff] -inf
          %236 = vst [vmem:[#allocation3 + $0x20] sm:$0xff] -inf
          %237 = vst [vmem:[#allocation3 + $0x28] sm:$0xff] -inf
          %238 = vst [vmem:[#allocation3 + $0x30] sm:$0xff] -inf
          %239 = vst [vmem:[#allocation3 + $0x38] sm:$0xff] -inf
          %240 = vst [vmem:[#allocation3 + $0x40] sm:$0xff] -inf
          %241 = vst [vmem:[#allocation3 + $0x48] sm:$0xff] -inf
          %242 = vst [vmem:[#allocation3 + $0x50] sm:$0xff] -inf
          %243 = vst [vmem:[#allocation3 + $0x58] sm:$0xff] -inf
        $region40: #{tpu_custom_call.1} parent=31 // pred_fallthru
          _
        %v244 = vld [vmem:[%s189] sm:$0xff]
        %v245 = vld [vmem:[%s189 + $0x8] sm:$0xff]
        %v246 = vld [vmem:[%s189 + $0x10] sm:$0xff]
        %v247 = vld [vmem:[%s189 + $0x18] sm:$0xff]
        %v248 = vld [vmem:[%s189 + $0x20] sm:$0xff]
        %v249 = vld [vmem:[%s189 + $0x28] sm:$0xff]
        %v250 = vld [vmem:[%s189 + $0x30] sm:$0xff]
        %v251 = vld [vmem:[%s189 + $0x38] sm:$0xff]
        %v252 = vld [vmem:[%s189 + $0x40] sm:$0xff]
        %v253 = vld [vmem:[%s189 + $0x48] sm:$0xff]
        %v254 = vld [vmem:[%s189 + $0x50] sm:$0xff]
        %v255 = vld [vmem:[%s189 + $0x58] sm:$0xff]
        %s256 = smul.u32 %s25, 384
        %v257 = vlaneseq
        %v258 = vand.u32 %v257, 127
        %v259 = vadd.s32 %v258, 128
        %v260 = vadd.s32 %v258, 256
        %v261 = vstv %s256
        %v262 = vadd.s32 %v261, %v258
        %v263 = vadd.s32 %v261, %v259
        %v264 = vadd.s32 %v261, %v260
        %vm265 = vcmp.lt.s32.totalorder %v262, 400
        %vm266 = vcmp.lt.s32.totalorder %v263, 400
        %vm267 = vcmp.lt.s32.totalorder %v264, 400
        %v268 = vld [vmem:[#allocation2] sm:$0xff]
        %v269 = vld [vmem:[#allocation2 + $0x8] sm:$0xff]
        %v270 = vld [vmem:[#allocation2 + $0x10] sm:$0xff]
        %v271 = vld [vmem:[#allocation2 + $0x18] sm:$0xff]
        %v272 = vld [vmem:[#allocation2 + $0x20] sm:$0xff]
        %v273 = vld [vmem:[#allocation2 + $0x28] sm:$0xff]
        %v274 = vld [vmem:[#allocation2 + $0x30] sm:$0xff]
        %v275 = vld [vmem:[#allocation2 + $0x38] sm:$0xff]
        %v276 = vld [vmem:[#allocation2 + $0x40] sm:$0xff]
        %v277 = vld [vmem:[#allocation2 + $0x48] sm:$0xff]
        %v278 = vld [vmem:[#allocation2 + $0x50] sm:$0xff]
        %v279 = vld [vmem:[#allocation2 + $0x58] sm:$0xff]
        %v280 = vsel %vm265, %v244, 0.0
        %v281 = vsel %vm266, %v245, 0.0
        %v282 = vsel %vm267, %v246, 0.0
        %v283 = vsel %vm265, %v247, 0.0
        %v284 = vsel %vm266, %v248, 0.0
        %v285 = vsel %vm267, %v249, 0.0
        %v286 = vsel %vm265, %v250, 0.0
        %v287 = vsel %vm266, %v251, 0.0
        %v288 = vsel %vm267, %v252, 0.0
        %v289 = vsel %vm265, %v253, 0.0
        %v290 = vsel %vm266, %v254, 0.0
        %v291 = vsel %vm267, %v255, 0.0
        %v292 = vadd.f32 %v268, %v280
        %v293 = vadd.f32 %v269, %v281
        %v294 = vadd.f32 %v270, %v282
        %v295 = vadd.f32 %v271, %v283
        %v296 = vadd.f32 %v272, %v284
        %v297 = vadd.f32 %v273, %v285
        %v298 = vadd.f32 %v274, %v286
        %v299 = vadd.f32 %v275, %v287
        %v300 = vadd.f32 %v276, %v288
        %v301 = vadd.f32 %v277, %v289
        %v302 = vadd.f32 %v278, %v290
        %v303 = vadd.f32 %v279, %v291
        %304 = vst [vmem:[#allocation2] sm:$0xff] %v292
        %305 = vst [vmem:[#allocation2 + $0x8] sm:$0xff] %v293
        %306 = vst [vmem:[#allocation2 + $0x10] sm:$0xff] %v294
        %307 = vst [vmem:[#allocation2 + $0x18] sm:$0xff] %v295
        %308 = vst [vmem:[#allocation2 + $0x20] sm:$0xff] %v296
        %309 = vst [vmem:[#allocation2 + $0x28] sm:$0xff] %v297
        %310 = vst [vmem:[#allocation2 + $0x30] sm:$0xff] %v298
        %311 = vst [vmem:[#allocation2 + $0x38] sm:$0xff] %v299
        %312 = vst [vmem:[#allocation2 + $0x40] sm:$0xff] %v300
        %313 = vst [vmem:[#allocation2 + $0x48] sm:$0xff] %v301
        %314 = vst [vmem:[#allocation2 + $0x50] sm:$0xff] %v302
        %315 = vst [vmem:[#allocation2 + $0x58] sm:$0xff] %v303
        %v316 = vld [vmem:[#allocation3] sm:$0xff]
        %v317 = vld [vmem:[#allocation3 + $0x8] sm:$0xff]
        %v318 = vld [vmem:[#allocation3 + $0x10] sm:$0xff]
        %v319 = vld [vmem:[#allocation3 + $0x18] sm:$0xff]
        %v320 = vld [vmem:[#allocation3 + $0x20] sm:$0xff]
        %v321 = vld [vmem:[#allocation3 + $0x28] sm:$0xff]
        %v322 = vld [vmem:[#allocation3 + $0x30] sm:$0xff]
        %v323 = vld [vmem:[#allocation3 + $0x38] sm:$0xff]
        %v324 = vld [vmem:[#allocation3 + $0x40] sm:$0xff]
        %v325 = vld [vmem:[#allocation3 + $0x48] sm:$0xff]
        %v326 = vld [vmem:[#allocation3 + $0x50] sm:$0xff]
        %v327 = vld [vmem:[#allocation3 + $0x58] sm:$0xff]
        %v328 = vsel %vm265, %v244, -inf
        %v329 = vsel %vm266, %v245, -inf
        %v330 = vsel %vm267, %v246, -inf
        %v331 = vsel %vm265, %v247, -inf
        %v332 = vsel %vm266, %v248, -inf
        %v333 = vsel %vm267, %v249, -inf
        %v334 = vsel %vm265, %v250, -inf
        %v335 = vsel %vm266, %v251, -inf
        %v336 = vsel %vm267, %v252, -inf
        %v337 = vsel %vm265, %v253, -inf
        %v338 = vsel %vm266, %v254, -inf
        %v339 = vsel %vm267, %v255, -inf
        %v340 = vmax.f32 %v316, %v328
        %v341 = vmax.f32 %v317, %v329
        %v342 = vmax.f32 %v318, %v330
        %v343 = vmax.f32 %v319, %v331
        %v344 = vmax.f32 %v320, %v332
        %v345 = vmax.f32 %v321, %v333
        %v346 = vmax.f32 %v322, %v334
        %v347 = vmax.f32 %v323, %v335
        %v348 = vmax.f32 %v324, %v336
        %v349 = vmax.f32 %v325, %v337
        %v350 = vmax.f32 %v326, %v338
        %v351 = vmax.f32 %v327, %v339
        %352 = vst [vmem:[#allocation3] sm:$0xff] %v340
        %353 = vst [vmem:[#allocation3 + $0x8] sm:$0xff] %v341
        %354 = vst [vmem:[#allocation3 + $0x10] sm:$0xff] %v342
        %355 = vst [vmem:[#allocation3 + $0x18] sm:$0xff] %v343
        %356 = vst [vmem:[#allocation3 + $0x20] sm:$0xff] %v344
        %357 = vst [vmem:[#allocation3 + $0x28] sm:$0xff] %v345
        %358 = vst [vmem:[#allocation3 + $0x30] sm:$0xff] %v346
        %359 = vst [vmem:[#allocation3 + $0x38] sm:$0xff] %v347
        %360 = vst [vmem:[#allocation3 + $0x40] sm:$0xff] %v348
        %361 = vst [vmem:[#allocation3 + $0x48] sm:$0xff] %v349
        %362 = vst [vmem:[#allocation3 + $0x50] sm:$0xff] %v350
        %363 = vst [vmem:[#allocation3 + $0x58] sm:$0xff] %v351
        %p364 = scmp.eq.s32.totalorder %s25, 1
        // Predicated region
        $region41: #{tpu_custom_call.1} parent=31 // pred_check
          %p365 = pneg %p364
        $region42: #{tpu_custom_call.1} parent=31 // pred_check_branch
          %367 = sbr.rel (%p365) target = $region44
        $region43: #{tpu_custom_call.1} parent=31 // pred_region
          %v368 = vld [vmem:[#allocation2] sm:$0xff]
          %v369 = vld [vmem:[#allocation2 + $0x8] sm:$0xff]
          %v370 = vld [vmem:[#allocation2 + $0x10] sm:$0xff]
          %v371 = vld [vmem:[#allocation2 + $0x18] sm:$0xff]
          %v372 = vld [vmem:[#allocation2 + $0x20] sm:$0xff]
          %v373 = vld [vmem:[#allocation2 + $0x28] sm:$0xff]
          %v374 = vld [vmem:[#allocation2 + $0x30] sm:$0xff]
          %v375 = vld [vmem:[#allocation2 + $0x38] sm:$0xff]
          %v376 = vld [vmem:[#allocation2 + $0x40] sm:$0xff]
          %v377 = vld [vmem:[#allocation2 + $0x48] sm:$0xff]
          %v378 = vld [vmem:[#allocation2 + $0x50] sm:$0xff]
          %v379 = vld [vmem:[#allocation2 + $0x58] sm:$0xff]
          %v380 = vadd.f32 %v368, %v369
          %v381 = vadd.f32 %v380, %v370
          %382 = vadd.xlane.f32.xlu0 %v381
          %v383 = vpop.xlane.xlu0 %382
          %v384 = vadd.f32 %v371, %v372
          %v385 = vadd.f32 %v384, %v373
          %386 = vadd.xlane.f32.xlu0 %v385
          %v387 = vpop.xlane.xlu0 %386
          %v388 = vadd.f32 %v374, %v375
          %v389 = vadd.f32 %v388, %v376
          %390 = vadd.xlane.f32.xlu0 %v389
          %v391 = vpop.xlane.xlu0 %390
          %v392 = vadd.f32 %v377, %v378
          %v393 = vadd.f32 %v392, %v379
          %394 = vadd.xlane.f32.xlu0 %v393
          %v395 = vpop.xlane.xlu0 %394
          %v396 = vmul.f32 %v383, 0.0025
          %v397 = vmul.f32 %v387, 0.0025
          %v398 = vmul.f32 %v391, 0.0025
          %v399 = vmul.f32 %v395, 0.0025
          %v400 = vld [vmem:[#allocation3] sm:$0xff]
          %v401 = vld [vmem:[#allocation3 + $0x8] sm:$0xff]
          %v402 = vld [vmem:[#allocation3 + $0x10] sm:$0xff]
          %v403 = vld [vmem:[#allocation3 + $0x18] sm:$0xff]
          %v404 = vld [vmem:[#allocation3 + $0x20] sm:$0xff]
          %v405 = vld [vmem:[#allocation3 + $0x28] sm:$0xff]
          %v406 = vld [vmem:[#allocation3 + $0x30] sm:$0xff]
          %v407 = vld [vmem:[#allocation3 + $0x38] sm:$0xff]
          %v408 = vld [vmem:[#allocation3 + $0x40] sm:$0xff]
          %v409 = vld [vmem:[#allocation3 + $0x48] sm:$0xff]
          %v410 = vld [vmem:[#allocation3 + $0x50] sm:$0xff]
          %v411 = vld [vmem:[#allocation3 + $0x58] sm:$0xff]
          %v412 = vmax.f32 %v400, %v401
          %v413 = vmax.f32 %v412, %v402
          %414 = vmax.xlane.f32.xlu0 %v413
          %v415 = vpop.xlane.xlu0 %414
          %v416 = vmax.f32 %v403, %v404
          %v417 = vmax.f32 %v416, %v405
          %418 = vmax.xlane.f32.xlu0 %v417
          %v419 = vpop.xlane.xlu0 %418
          %v420 = vmax.f32 %v406, %v407
          %v421 = vmax.f32 %v420, %v408
          %422 = vmax.xlane.f32.xlu0 %v421
          %v423 = vpop.xlane.xlu0 %422
          %v424 = vmax.f32 %v409, %v410
          %v425 = vmax.f32 %v424, %v411
          %426 = vmax.xlane.f32.xlu0 %v425
          %v427 = vpop.xlane.xlu0 %426
          %vm428 = vcmp.eq.s32.totalorder %v258, 0
          %v429 = vsel %vm428, %v396, %v415
          %v430 = vsel %vm428, %v397, %v419
          %v431 = vsel %vm428, %v398, %v423
          %v432 = vsel %vm428, %v399, %v427
          %v433 = vld [vmem:[%s1] sm:$0x3]
          %v434 = vld [vmem:[%s2] sm:$0xff]
          %v435 = vld [vmem:[%s2 + $0x8] sm:$0xff]
          %v436 = vld [vmem:[%s2 + $0x10] sm:$0xff]
          %v437 = vld [vmem:[%s2 + $0x18] sm:$0xff]
          %vm438 = vcmask 261120
          %v440 = vsel %vm438, %v433, 0
          %442 = vmatprep.subr.mxu0 0.0
          %443 = vmatpush1.msra.mxu0 0.0
          %444 = vmatprep.subr.mxu0 0.0
          %445 = vmatpush1.msra.mxu0 0.0
          %446 = vmatprep.subr.mxu0 0.0
          %447 = vmatpush1.msra.mxu0 0.0
          %448 = vmatprep.subr.mxu0 0.0
          %449 = vmatpush1.msra.mxu0 0.0
          %450 = vmatprep.subr.mxu0 0.0
          %451 = vmatpush1.msra.mxu0 0.0
          %452 = vmatprep.subr.mxu0 0.0
          %453 = vmatpush1.msra.mxu0 0.0
          %454 = vmatprep.subr.mxu0 0.0
          %455 = vmatpush1.msra.mxu0 0.0
          %456 = vmatprep.subr.mxu0 0.0
          %457 = vmatpush1.msra.mxu0 0.0
          %458 = vmatprep.subr.mxu0 0.0
          %459 = vmatpush1.msra.mxu0 0.0
          %460 = vmatprep.subr.mxu0 0.0
          %461 = vmatpush1.msra.mxu0 0.0
          %462 = vmatprep.subr.mxu0 0.0
          %463 = vmatpush1.msra.mxu0 0.0
          %464 = vmatprep.subr.mxu0 0.0
          %465 = vmatpush1.msra.mxu0 0.0
          %466 = vmatprep.subr.mxu0 0.0
          %467 = vmatpush1.msra.mxu0 %v432
          %468 = vmatprep.subr.mxu0 0.0
          %469 = vmatpush1.msra.mxu0 %v431
          %470 = vmatprep.subr.mxu0 0.0
          %471 = vmatpush1.msra.mxu0 %v430
          %472 = vmatprep.subr.mxu0 0.0
          %473 = vmatpush1.msra.mxu0 %v429
          %474 = vmatprep.subr.mxu0 0.0
          %475 = vmatpush2.msra.mxu0 0.0
          %476 = vmatprep.subr.mxu0 0.0
          %477 = vmatpush2.msra.mxu0 0.0
          %478 = vmatprep.subr.mxu0 0.0
          %479 = vmatpush2.msra.mxu0 0.0
          %480 = vmatprep.subr.mxu0 0.0
          %481 = vmatpush2.msra.mxu0 0.0
          %482 = vmatprep.subr.mxu0 0.0
          %483 = vmatpush2.msra.mxu0 0.0
          %484 = vmatprep.subr.mxu0 0.0
          %485 = vmatpush2.msra.mxu0 0.0
          %486 = vmatprep.subr.mxu0 0.0
          %487 = vmatpush2.msra.mxu0 0.0
          %488 = vmatprep.subr.mxu0 0.0
          %489 = vmatpush2.msra.mxu0 0.0
          %490 = vmatprep.subr.mxu0 0.0
          %491 = vmatpush2.msra.mxu0 0.0
          %492 = vmatprep.subr.mxu0 0.0
          %493 = vmatpush2.msra.mxu0 0.0
          %494 = vmatprep.subr.mxu0 0.0
          %495 = vmatpush2.msra.mxu0 0.0
          %496 = vmatprep.subr.mxu0 0.0
          %497 = vmatpush2.msra.mxu0 0.0
          %498 = vmatprep.subr.mxu0 0.0
          %499 = vmatpush2.msra.mxu0 0.0
          %500 = vmatprep.subr.mxu0 0.0
          %501 = vmatpush2.msra.mxu0 0.0
          %502 = vmatprep.subr.mxu0 0.0
          %503 = vmatpush2.msra.mxu0 0.0
          %504 = vmatprep.subr.mxu0 0.0
          %505 = vmatpush2.msra.mxu0 0.0
          %506 = vmatprep.mubr.f32.mxu0 0.0
          %507 = vmatmul.mubr.f32.gmra.mxu0 %v440
          %v508 = vpop.f32.mrf.mxu0
          %v509 = vadd.f32 0.0, %v508
          %v510 = vpop.f32.mrf.mxu0
          %511 = vdwg.mxu0
          %v512 = vmax.f32 %v509, 0.0
          %513 = vxpose.xlu0.b32.start [1/16] %v512, 128
          %514 = vxpose.xlu0.b32.cont [2/16] 0.0, 128
          %515 = vxpose.xlu0.b32.cont [3/16] 0.0, 128
          %516 = vxpose.xlu0.b32.cont [4/16] 0.0, 128
          %517 = vxpose.xlu0.b32.cont [5/16] 0.0, 128
          %518 = vxpose.xlu0.b32.cont [6/16] 0.0, 128
          %519 = vxpose.xlu0.b32.cont [7/16] 0.0, 128
          %520 = vxpose.xlu0.b32.cont [8/16] 0.0, 128
          %521 = vxpose.xlu0.b32.cont [9/16] 0.0, 128
          %522 = vxpose.xlu0.b32.cont [10/16] 0.0, 128
          %523 = vxpose.xlu0.b32.cont [11/16] 0.0, 128
          %524 = vxpose.xlu0.b32.cont [12/16] 0.0, 128
          %525 = vxpose.xlu0.b32.cont [13/16] 0.0, 128
          %526 = vxpose.xlu0.b32.cont [14/16] 0.0, 128
          %527 = vxpose.xlu0.b32.cont [15/16] 0.0, 128
          %528 = vxpose.xlu0.b32.end [16/16] 0.0, 128
          %v529 = vpop.trf.xlu0
          %v530 = vpop.trf.xlu0
          %v531 = vpop.trf.xlu0
          %v532 = vpop.trf.xlu0
          %v533 = vpop.trf.xlu0
          %v534 = vpop.trf.xlu0
          %v535 = vpop.trf.xlu0
          %v536 = vpop.trf.xlu0
          %v537 = vpop.trf.xlu0
          %v538 = vpop.trf.xlu0
          %v539 = vpop.trf.xlu0
          %v540 = vpop.trf.xlu0
          %v541 = vpop.trf.xlu0
          %v542 = vpop.trf.xlu0
          %v543 = vpop.trf.xlu0
          %v544 = vpop.trf.xlu0
          %vm545 = vcmask 15360
          %v547 = vsel %vm545, %v529, 0
          %v550 = vsel %vm545, %v434, 0
          %v553 = vsel %vm545, %v435, 0
          %v556 = vsel %vm545, %v436, 0
          %v559 = vsel %vm545, %v437, 0
          %561 = vmatprep.subr.mxu0 0.0
          %562 = vmatpush1.xpose.msra.mxu0 0.0
          %563 = vmatprep.subr.mxu0 0.0
          %564 = vmatpush1.xpose.msra.mxu0 0.0
          %565 = vmatprep.subr.mxu0 0.0
          %566 = vmatpush1.xpose.msra.mxu0 0.0
          %567 = vmatprep.subr.mxu0 0.0
          %568 = vmatpush1.xpose.msra.mxu0 0.0
          %569 = vmatprep.subr.mxu0 0.0
          %570 = vmatpush1.xpose.msra.mxu0 0.0
          %571 = vmatprep.subr.mxu0 0.0
          %572 = vmatpush1.xpose.msra.mxu0 0.0
          %573 = vmatprep.subr.mxu0 0.0
          %574 = vmatpush1.xpose.msra.mxu0 0.0
          %575 = vmatprep.subr.mxu0 0.0
          %576 = vmatpush1.xpose.msra.mxu0 0.0
          %577 = vmatprep.subr.mxu0 0.0
          %578 = vmatpush1.xpose.msra.mxu0 0.0
          %579 = vmatprep.subr.mxu0 0.0
          %580 = vmatpush1.xpose.msra.mxu0 0.0
          %581 = vmatprep.subr.mxu0 0.0
          %582 = vmatpush1.xpose.msra.mxu0 0.0
          %583 = vmatprep.subr.mxu0 0.0
          %584 = vmatpush1.xpose.msra.mxu0 0.0
          %585 = vmatprep.subr.mxu0 0.0
          %586 = vmatpush1.xpose.msra.mxu0 %v559
          %587 = vmatprep.subr.mxu0 0.0
          %588 = vmatpush1.xpose.msra.mxu0 %v556
          %589 = vmatprep.subr.mxu0 0.0
          %590 = vmatpush1.xpose.msra.mxu0 %v553
          %591 = vmatprep.subr.mxu0 0.0
          %592 = vmatpush1.xpose.msra.mxu0 %v550
          %593 = vmatprep.subr.mxu0 0.0
          %594 = vmatpush2.xpose.msra.mxu0 0.0
          %595 = vmatprep.subr.mxu0 0.0
          %596 = vmatpush2.xpose.msra.mxu0 0.0
          %597 = vmatprep.subr.mxu0 0.0
          %598 = vmatpush2.xpose.msra.mxu0 0.0
          %599 = vmatprep.subr.mxu0 0.0
          %600 = vmatpush2.xpose.msra.mxu0 0.0
          %601 = vmatprep.subr.mxu0 0.0
          %602 = vmatpush2.xpose.msra.mxu0 0.0
          %603 = vmatprep.subr.mxu0 0.0
          %604 = vmatpush2.xpose.msra.mxu0 0.0
          %605 = vmatprep.subr.mxu0 0.0
          %606 = vmatpush2.xpose.msra.mxu0 0.0
          %607 = vmatprep.subr.mxu0 0.0
          %608 = vmatpush2.xpose.msra.mxu0 0.0
          %609 = vmatprep.subr.mxu0 0.0
          %610 = vmatpush2.xpose.msra.mxu0 0.0
          %611 = vmatprep.subr.mxu0 0.0
          %612 = vmatpush2.xpose.msra.mxu0 0.0
          %613 = vmatprep.subr.mxu0 0.0
          %614 = vmatpush2.xpose.msra.mxu0 0.0
          %615 = vmatprep.subr.mxu0 0.0
          %616 = vmatpush2.xpose.msra.mxu0 0.0
          %617 = vmatprep.subr.mxu0 0.0
          %618 = vmatpush2.xpose.msra.mxu0 0.0
          %619 = vmatprep.subr.mxu0 0.0
          %620 = vmatpush2.xpose.msra.mxu0 0.0
          %621 = vmatprep.subr.mxu0 0.0
          %622 = vmatpush2.xpose.msra.mxu0 0.0
          %623 = vmatprep.subr.mxu0 0.0
          %624 = vmatpush2.xpose.msra.mxu0 0.0
          %625 = vmatprep.mubr.f32.mxu0 0.0
          %626 = vmatmul.mubr.f32.gmra.mxu0 %v547
          %v627 = vpop.f32.mrf.mxu0
          %v628 = vadd.f32 0.0, %v627
          %v629 = vpop.f32.mrf.mxu0
          %630 = vdwg.mxu0
          %vm631 = vcmask 254976
          %v632 = vsel %vm631, %v628, 0.0
          %v633 = vrot.slane %v632, 4
          %v634 = vadd.f32 %v632, %v633
          %v635 = vrot.slane %v634, 2
          %v636 = vadd.f32 %v634, %v635
          %v637 = vrot.slane %v636, 1
          %v638 = vadd.f32 %v636, %v637
          %v639 = vxor.u32 %v638, 2147483648
          %v640 = vmul.f32 %v639, 1.442695
          %v641 = vpow.pop %v640
          %v642 = vadd.f32 %v641, 1.0
          %v643 = vrcp.pop %v642
          %v644 = vmul.f32 1.0, %v643
          %vm645 = vcmask 253952
          %646 = vst.msk [vmem:[%s210] sm:$0x1] %vm645, %v644
        $region44: #{tpu_custom_call.1} parent=31 // pred_fallthru
          _
        %s647 = sand.u32 %s110, 1
        %s648 = scalar_lea.sflag [#allocation6], %s647
        %s649 = sand.u32 %s110, 1
        %s650 = scalar_lea.vmem [#allocation7], %s649
        // Predicated region
        $region45: #{tpu_custom_call.1} parent=31 // pred_check
          %p651 = pneg %p120
        $region46: #{tpu_custom_call.1} parent=31 // pred_check_branch
          %653 = sbr.rel (%p651) target = $region48
        $region47: #{tpu_custom_call.1} parent=31 // pred_region
          %s655 = ssub.s32 16, 16
          %656 = vsyncadd %s648, %s655
          %s657 = smul.addr %s24, 16
          %s658 = scalar_lea.hbm %s3, %s657
          %s660 = sshll.u32 %s650, 4
          %s661 = int_to_ptr.vmem [resolvable:$true] %s660
          %663 = dma.vmem_to_hbm [thread:$0]  %s661, 16, %s658, %s648
        $region48: #{tpu_custom_call.1} parent=31 // pred_fallthru
          _
      $region32: #{tpu_custom_call.1} parent=5 // pred_fallthru
        _
      %p664 = scmp.le.s32.totalorder 2, %s15
      // Predicated region
      $region49: #{tpu_custom_call.1} parent=5 // pred_check
        %p665 = pneg %p664
      $region50: #{tpu_custom_call.1} parent=5 // pred_check_branch
        %667 = sbr.rel (%p665) target = $region52
      $region51: #{tpu_custom_call.1} parent=5 // pred_region
        %s668 = ssub.s32 %s15, 2
        // Predicated region
        $region53: #{tpu_custom_call.1} parent=51 // pred_check
          %p669 = pneg %p126
        $region54: #{tpu_custom_call.1} parent=51 // pred_check_branch
          %671 = sbr.rel (%p669) target = $region56
        $region55: #{tpu_custom_call.1} parent=51 // pred_region
          %s672 = sand.u32 %s111, 1
          %s673 = scalar_lea.sflag [#allocation6], %s672
          %s674 = sand.u32 %s111, 1
          %s675 = scalar_lea.vmem [#allocation7], %s674
          %676 = dma.done %s673, 16
        $region56: #{tpu_custom_call.1} parent=51 // pred_fallthru
          _
      $region52: #{tpu_custom_call.1} parent=5 // pred_fallthru
        _
    $region6: #{tpu_custom_call.1} parent=1 // loop_footer
      %s19 = sadd.s32 1, %s15
    $region7: #{tpu_custom_call.1} parent=1 // loop_footer_branch
      %14 = sbr.rel target = $region3
    $region8: #{tpu_custom_call.1} parent=1 // loop_exit
      _
    %677 = vsyncpa [#allocation5], 1
    %s678 = scalar_lea.sflag [#allocation5], 1
    %679 = vsyncpa %s678, 1
    %680 = vsyncpa [#allocation6], 1
    %s681 = scalar_lea.sflag [#allocation6], 1
    %682 = vsyncpa %s681, 1

</llo_original>
